<compile_context>
chip_gen: v5e
topology: v5e:2x2
jax: 0.10.0
libtpu: 0.0.40
codegen_flags: <defaults>
</compile_context>

<pallas_src>
import functools

import jax
import jax.numpy as jnp
from jax.experimental import pallas as pl
from jax.experimental.pallas import tpu as pltpu

NEG_SLOPE = 0.01  # PyTorch LeakyReLU default


def _leaky_relu(x):
    return jnp.where(x >= 0, x, NEG_SLOPE * x)


def memlinear_kernel(x_ref, wf_t_ref, bf_ref, wg_t_ref, bg_ref, out_ref):
    """Additive-coupling forward on one (TB, 2*C) batch tile.

    x_ref              : (TB, 2*C) input tile, [x1 | x2] along the lane axis
    wf_t_ref, wg_t_ref : (C, C) weight-normalized weights, already (C_in, C_out)
    bf_ref, bg_ref     : (1, C) biases (kept f32 even on the bf16 path)
    out_ref            : (TB, 2*C) output tile, [y1 | y2]
    """
    c = wf_t_ref.shape[0]
    # C is a multiple of 128 (asserted in the wrapper), so these half-width views are
    # lane-tile aligned -> zero-cost ref views, no relayout.
    x1 = x_ref[:, :c]
    x2 = x_ref[:, c:]

    # Fm(x2) = LeakyReLU(x2 @ Wf^T + bf); matmul in I/O dtype, f32 accumulation.
    f = jnp.dot(x2, wf_t_ref[...], preferred_element_type=jnp.float32) + bf_ref[...]
    y1 = x1.astype(jnp.float32) + _leaky_relu(f)          # elementwise kept in f32 (v5e VPU)

    # Gm(y1) = LeakyReLU(y1 @ Wg^T + bg); cast y1 to the weight dtype for the MXU.
    g = jnp.dot(y1.astype(wg_t_ref.dtype), wg_t_ref[...],
                preferred_element_type=jnp.float32) + bg_ref[...]
    y2 = x2.astype(jnp.float32) + _leaky_relu(g)

    out_ref[:, :c] = y1.astype(out_ref.dtype)
    out_ref[:, c:] = y2.astype(out_ref.dtype)


def _weight_norm_t(v, g):
    """PyTorch nn.utils.weight_norm for Linear (dim=0), returned pre-transposed.

    W[i, :] = g[i] * v[i, :] / ||v[i, :]||  ->  returns W^T with shape (C_in, C_out)
    so the kernel computes x @ W^T as a plain row-major MXU matmul.
    """
    scale = g / jnp.sqrt(jnp.sum(v * v, axis=1))  # (C_out,)
    return v.T * scale[None, :]                   # (C_in, C_out)


def _round_up(v, m):
    return ((v + m - 1) // m) * m


def _round_down(v, m):
    return (v // m) * m


def _sublane_quantum(dtype):
    """Minimum batch-tile multiple so the (TB, 2C) BlockSpec satisfies TPU tiling."""
    return {4: 8, 2: 16, 1: 32}.get(jnp.dtype(dtype).itemsize, 8)


def _choose_tb(b, block_b, sub):
    """Batch tile: multiple of `sub` (or full batch), <= block_b, and small enough that
    the grid has >= 2 steps whenever the batch allows it (v7x megacore utilization)."""
    block_b = max(sub, _round_down(block_b, sub))
    if b < 2 * sub:
        return b  # single full-extent block (block == full dim is always legal)
    two_step = _round_up((b + 1) // 2, sub)  # smallest aligned tile covering b in 2 steps
    return min(block_b, two_step)


def _vmem_limit_bytes():
    """Generation-aware scoped-VMEM cap: ~3/4 of physical per-core VMEM."""
    try:
        phys = pltpu.get_tpu_info().vmem_capacity_bytes
    except Exception:  # not on TPU / API unavailable -> conservative default
        phys = 128 * 1024 * 1024
    if phys <= 64 * 1024 * 1024:       # v7x-class: 64 MiB physical per TensorCore
        return 48 * 1024 * 1024
    return 96 * 1024 * 1024            # v5e / v6e: 128 MiB physical


def _x_block_spec(tb, two_c, n_steps):
    """Activation BlockSpec, triple-buffered when the grid is deep enough."""
    idx_map = lambda i: (i, 0)
    if n_steps >= 3 and hasattr(pl, "Buffered"):
        try:
            return pl.BlockSpec((tb, two_c), idx_map, pipeline_mode=pl.Buffered(3))
        except TypeError:  # pipeline_mode not supported in this jax version
            pass
    return pl.BlockSpec((tb, two_c), idx_map)


@functools.partial(jax.jit, static_argnames=("block_b", "compute_dtype", "alias_input"))
def mem_linear_forward(x, params, *, block_b=4096, compute_dtype=jnp.float32,
                       alias_input=False):
    """x: (B, 2*C) float32. params: raw weight_norm params (vf, gf, bf, vg, gg, bg).

    compute_dtype=jnp.bfloat16 switches to bf16 activations/weights in HBM and bf16 MXU
    inputs (f32 accumulation + f32 elementwise) -> halves HBM traffic, changes numerics.
    alias_input=True lets the output reuse x's HBM buffer (input_output_aliases={0: 0}).
    """
    io_dtype = jnp.dtype(compute_dtype)
    b, two_c = x.shape
    c = two_c // 2
    assert two_c == 2 * c, "feature dim must be even (AdditiveCoupling split)"
    # The in-kernel half-width views are only zero-cost when C is lane aligned.
    assert c % 128 == 0, "MemLinear Pallas kernel requires channel % 128 == 0"

    # Fused weight prep (normalize + transpose + cast) under the same jit as the call.
    wf_t = _weight_norm_t(params["vf"], params["gf"]).astype(io_dtype)
    wg_t = _weight_norm_t(params["vg"], params["gg"]).astype(io_dtype)
    bf = params["bf"].reshape(1, c).astype(jnp.float32)
    bg = params["bg"].reshape(1, c).astype(jnp.float32)
    x_io = x.astype(io_dtype)

    sub = _sublane_quantum(io_dtype)
    tb = _choose_tb(b, block_b, sub)
    n_steps = pl.cdiv(b, tb)
    grid = (n_steps,)

    esize = io_dtype.itemsize
    cost = pl.CostEstimate(
        flops=4 * b * c * c,                                    # two (B,C)x(C,C) matmuls
        transcendentals=0,
        bytes_accessed=2 * b * two_c * esize + 2 * c * c * esize + 2 * c * 4,
    )

    return pl.pallas_call(
        memlinear_kernel,
        out_shape=jax.ShapeDtypeStruct((b, two_c), io_dtype),
        grid=grid,
        in_specs=[
            _x_block_spec(tb, two_c, n_steps),             # x tile (pipelined, >=2 buffers)
            pl.BlockSpec((c, c), lambda i: (0, 0)),        # Wf^T (VMEM resident)
            pl.BlockSpec((1, c), lambda i: (0, 0)),        # bf   (resident)
            pl.BlockSpec((c, c), lambda i: (0, 0)),        # Wg^T (resident)
            pl.BlockSpec((1, c), lambda i: (0, 0)),        # bg   (resident)
        ],
        out_specs=pl.BlockSpec((tb, two_c), lambda i: (i, 0)),
        compiler_params=pltpu.CompilerParams(
            dimension_semantics=("parallel",),             # rows independent -> megacore
            vmem_limit_bytes=_vmem_limit_bytes(),          # generation-aware cap
        ),
        cost_estimate=cost,
        input_output_aliases=({0: 0} if alias_input else {}),
    )(x_io, wf_t, bf, wg_t, bg)


def mem_linear_reference(x, params):
    """Pure-JAX reference of memcnn.AdditiveCoupling forward (float32)."""
    c = x.shape[1] // 2

    def weight_norm(v, g):
        norm = jnp.sqrt(jnp.sum(v * v, axis=1, keepdims=True))
        return (g[:, None] / norm) * v

    wf = weight_norm(params["vf"], params["gf"])
    wg = weight_norm(params["vg"], params["gg"])
    x1, x2 = x[:, :c], x[:, c:]
    y1 = x1 + _leaky_relu(x2 @ wf.T + params["bf"])
    y2 = x2 + _leaky_relu(y1 @ wg.T + params["bg"])
    return jnp.concatenate([y1, y2], axis=1)


if __name__ == "__main__":
    channel = 128   # per-half feature size (Linear(channel, channel)); lane-aligned
    batch = 48

    key = jax.random.PRNGKey(0)
    k_x, k_vf, k_gf, k_bf, k_vg, k_gg, k_bg = jax.random.split(key, 7)

    # Deterministic synthetic parameters (weight_norm raw v, g and bias per branch).
    params = {
        "vf": jax.random.normal(k_vf, (channel, channel), jnp.float32) * 0.05,
        "gf": jax.random.uniform(k_gf, (channel,), jnp.float32, 0.5, 1.5),
        "bf": jax.random.normal(k_bf, (channel,), jnp.float32) * 0.02,
        "vg": jax.random.normal(k_vg, (channel, channel), jnp.float32) * 0.05,
        "gg": jax.random.uniform(k_gg, (channel,), jnp.float32, 0.5, 1.5),
        "bg": jax.random.normal(k_bg, (channel,), jnp.float32) * 0.02,
    }

    # Input: (batch, 2*channel) — AdditiveCoupling splits the feature dim in two.
    x = jax.random.normal(k_x, (batch, 2 * channel), jnp.float32)

    ref = mem_linear_reference(x, params)

    # 1) fp32, default tiling: tb clamps to ceil(B/2) -> a 2-step "parallel" grid so both
    #    TensorCores / DMA engines are used on v7x. Strict tolerance vs the reference.
    out = jax.block_until_ready(mem_linear_forward(x, params))
    assert out.shape == (batch, 2 * channel)
    assert jnp.allclose(out, ref, atol=1e-5, rtol=1e-5), "fp32 default mismatch"

    # 2) fp32, tiny block -> 6 grid steps; exercises the deep-buffered pipeline path.
    out_small = jax.block_until_ready(mem_linear_forward(x, params, block_b=8))
    assert jnp.allclose(out_small, ref, atol=1e-5, rtol=1e-5), "fp32 tiled mismatch"

    # 3) fp32 with the output aliased over x's HBM buffer (footprint optimization).
    out_alias = jax.block_until_ready(mem_linear_forward(x, params, alias_input=True))
    assert jnp.allclose(out_alias, ref, atol=1e-5, rtol=1e-5), "aliased mismatch"

    # 4) opt-in bf16 I/O + bf16 MXU inputs (f32 accumulate): halves HBM traffic on this
    #    bandwidth-bound kernel; numerics differ from fp32, so relaxed tolerance.
    out_bf16 = jax.block_until_ready(
        mem_linear_forward(x, params, compute_dtype=jnp.bfloat16))
    assert jnp.allclose(out_bf16.astype(jnp.float32), ref,
                        atol=7.5e-2, rtol=5e-2), "bf16 mismatch"

    print("KERNEL_OK")
</pallas_src>

<mosaic_0001>
module attributes {stable_mosaic.version = 11 : i64} {
  func.func @memlinear_kernel(%arg0: i32, %arg1: memref<24x256xf32, #tpu.memory_space<vmem>>, %arg2: memref<128x128xf32, #tpu.memory_space<vmem>>, %arg3: memref<1x128xf32, #tpu.memory_space<vmem>>, %arg4: memref<128x128xf32, #tpu.memory_space<vmem>>, %arg5: memref<1x128xf32, #tpu.memory_space<vmem>>, %arg6: memref<24x256xf32, #tpu.memory_space<vmem>>) attributes {dimension_semantics = [#tpu.dimension_semantics<parallel>], iteration_bounds = array<i64: 2>, scalar_prefetch = 0 : i64, scratch_operands = 0 : i64, tpu.core_type = #tpu.core_type<tc>, window_params = [{transform_indices = @transform_0, window_bounds = array<i64: 24, 256>}, {pipeline_mode = #tpu.pipeline_mode<synchronous>, transform_indices = @transform_1, window_bounds = array<i64: 128, 128>}, {pipeline_mode = #tpu.pipeline_mode<synchronous>, transform_indices = @transform_2, window_bounds = array<i64: 1, 128>}, {pipeline_mode = #tpu.pipeline_mode<synchronous>, transform_indices = @transform_3, window_bounds = array<i64: 128, 128>}, {pipeline_mode = #tpu.pipeline_mode<synchronous>, transform_indices = @transform_4, window_bounds = array<i64: 1, 128>}, {transform_indices = @transform_5, window_bounds = array<i64: 24, 256>}]} {
    %c0 = arith.constant 0 : index
    %c0_0 = arith.constant 0 : index
    %0 = vector.load %arg1[%c0, %c0_0] : memref<24x256xf32, #tpu.memory_space<vmem>>, vector<24x128xf32>
    %c0_1 = arith.constant 0 : index
    %c128 = arith.constant 128 : index
    %1 = vector.load %arg1[%c0_1, %c128] : memref<24x256xf32, #tpu.memory_space<vmem>>, vector<24x128xf32>
    %c0_2 = arith.constant 0 : index
    %c0_3 = arith.constant 0 : index
    %2 = vector.load %arg2[%c0_2, %c0_3] : memref<128x128xf32, #tpu.memory_space<vmem>>, vector<128x128xf32>
    %cst = arith.constant dense<0.000000e+00> : vector<24x128xf32>
    %3 = tpu.matmul %1, %2, %cst {dimension_numbers = #tpu.dot_dimension_numbers<[1], [0], [0], [1], [0, 0, 1, 1], [], []>} : vector<24x128xf32>, vector<128x128xf32>, vector<24x128xf32> -> vector<24x128xf32>
    %c0_4 = arith.constant 0 : index
    %c0_5 = arith.constant 0 : index
    %4 = vector.load %arg3[%c0_4, %c0_5] : memref<1x128xf32, #tpu.memory_space<vmem>>, vector<1x128xf32>
    %5 = vector.broadcast %4 : vector<1x128xf32> to vector<24x128xf32>
    %6 = arith.addf %3, %5 : vector<24x128xf32>
    %cst_6 = arith.constant 0.000000e+00 : f32
    %7 = vector.broadcast %cst_6 : f32 to vector<24x128xf32>
    %8 = arith.cmpf oge, %6, %7 : vector<24x128xf32>
    %cst_7 = arith.constant 0.00999999977 : f32
    %9 = vector.broadcast %cst_7 : f32 to vector<24x128xf32>
    %10 = arith.mulf %9, %6 : vector<24x128xf32>
    %11 = arith.select %8, %6, %10 : vector<24x128xi1>, vector<24x128xf32>
    %12 = arith.addf %0, %11 : vector<24x128xf32>
    %c0_8 = arith.constant 0 : index
    %c0_9 = arith.constant 0 : index
    %13 = vector.load %arg4[%c0_8, %c0_9] : memref<128x128xf32, #tpu.memory_space<vmem>>, vector<128x128xf32>
    %cst_10 = arith.constant dense<0.000000e+00> : vector<24x128xf32>
    %14 = tpu.matmul %12, %13, %cst_10 {dimension_numbers = #tpu.dot_dimension_numbers<[1], [0], [0], [1], [0, 0, 1, 1], [], []>} : vector<24x128xf32>, vector<128x128xf32>, vector<24x128xf32> -> vector<24x128xf32>
    %c0_11 = arith.constant 0 : index
    %c0_12 = arith.constant 0 : index
    %15 = vector.load %arg5[%c0_11, %c0_12] : memref<1x128xf32, #tpu.memory_space<vmem>>, vector<1x128xf32>
    %16 = vector.broadcast %15 : vector<1x128xf32> to vector<24x128xf32>
    %17 = arith.addf %14, %16 : vector<24x128xf32>
    %cst_13 = arith.constant 0.000000e+00 : f32
    %18 = vector.broadcast %cst_13 : f32 to vector<24x128xf32>
    %19 = arith.cmpf oge, %17, %18 : vector<24x128xf32>
    %cst_14 = arith.constant 0.00999999977 : f32
    %20 = vector.broadcast %cst_14 : f32 to vector<24x128xf32>
    %21 = arith.mulf %20, %17 : vector<24x128xf32>
    %22 = arith.select %19, %17, %21 : vector<24x128xi1>, vector<24x128xf32>
    %23 = arith.addf %1, %22 : vector<24x128xf32>
    %c0_15 = arith.constant 0 : index
    %c0_16 = arith.constant 0 : index
    %24 = vector.load %arg6[%c0_15, %c0_16] : memref<24x256xf32, #tpu.memory_space<vmem>>, vector<24x128xf32>
    tpu.vector_store %arg6[%c0_15, %c0_16], %12 {strides = array<i32>} : memref<24x256xf32, #tpu.memory_space<vmem>>, vector<24x128xf32>,
    %c0_17 = arith.constant 0 : index
    %c128_18 = arith.constant 128 : index
    %25 = vector.load %arg6[%c0_17, %c128_18] : memref<24x256xf32, #tpu.memory_space<vmem>>, vector<24x128xf32>
    tpu.vector_store %arg6[%c0_17, %c128_18], %23 {strides = array<i32>} : memref<24x256xf32, #tpu.memory_space<vmem>>, vector<24x128xf32>,
    return
  }
  func.func @transform_0(%arg0: i32) -> (i32, i32) {
    %c0_i32 = arith.constant 0 : i32
    %c0_i32_0 = arith.constant 0 : i32
    return %arg0, %c0_i32 : i32, i32
  }
  func.func @transform_1(%arg0: i32) -> (i32, i32) {
    %c0_i32 = arith.constant 0 : i32
    %c0_i32_0 = arith.constant 0 : i32
    %c0_i32_1 = arith.constant 0 : i32
    return %c0_i32, %c0_i32_0 : i32, i32
  }
  func.func @transform_2(%arg0: i32) -> (i32, i32) {
    %c0_i32 = arith.constant 0 : i32
    %c0_i32_0 = arith.constant 0 : i32
    %c0_i32_1 = arith.constant 0 : i32
    return %c0_i32, %c0_i32_0 : i32, i32
  }
  func.func @transform_3(%arg0: i32) -> (i32, i32) {
    %c0_i32 = arith.constant 0 : i32
    %c0_i32_0 = arith.constant 0 : i32
    %c0_i32_1 = arith.constant 0 : i32
    return %c0_i32, %c0_i32_0 : i32, i32
  }
  func.func @transform_4(%arg0: i32) -> (i32, i32) {
    %c0_i32 = arith.constant 0 : i32
    %c0_i32_0 = arith.constant 0 : i32
    %c0_i32_1 = arith.constant 0 : i32
    return %c0_i32, %c0_i32_0 : i32, i32
  }
  func.func @transform_5(%arg0: i32) -> (i32, i32) {
    %c0_i32 = arith.constant 0 : i32
    %c0_i32_0 = arith.constant 0 : i32
    return %arg0, %c0_i32 : i32, i32
  }
}

</mosaic_0001>

<llo_original>
// kernel: mem_linear_forward.1
$region0: #{mem_linear_forward.1}
  #allocation0 [shape = 'u32[]', space=smem, size = 0x4, offset = 0x4, fixed_abs, tag = 'smem constant byte address 0x4 - core index']
  #allocation1 [shape = 'u32[72,128]{1,0:T(1,128)}', space=vmem, size = 0x9000, scoped, tag = 'internal scratch']
  %s0 = inlined_call_operand.vmem [shape: f32[48,256], index: 0, kind: input, shape index: {}]
  %s1 = inlined_call_operand.vmem [shape: f32[128,128], index: 1, kind: input, shape index: {}]
  %s2 = inlined_call_operand.vmem [shape: f32[1,128], index: 2, kind: input, shape index: {}]
  %s3 = inlined_call_operand.vmem [shape: f32[128,128], index: 3, kind: input, shape index: {}]
  %s4 = inlined_call_operand.vmem [shape: f32[1,128], index: 4, kind: input, shape index: {}]
  %s5 = inlined_call_operand.hbm [shape: f32[48,256], index: 5, kind: output, shape index: {}]
  %s6 = sld [smem:[#allocation0]]
  $region53: #{mem_linear_forward.1} parent=0
    _
  %s8 = ssub.s32 1, %s6
  %s9 = scalar_select 0, %s8, %s6
  $region1: #{mem_linear_forward.1} parent=0
    #allocation2 [shape = 'u8[49152]{0}', space=vmem, size = 0xc000, scoped, tag = 'output window, operand 0']
    #allocation3 [shape = 's32[2]{0}', space=sflag, size = 0x8, scoped, tag = 'scoped memory for mem_linear_forward.1']
    %10 = vsyncpa [#allocation3], 0
    %s11 = scalar_lea.sflag [#allocation3], 1
    %12 = vsyncpa %s11, 0
    loop: start=0, step=1, limit=4
    $region2: #{mem_linear_forward.1} parent=1 // loop_pre_header
      _
    $region3: #{mem_linear_forward.1} parent=1 // loop_header
      %s14 = sphi 0, %s18
      %p15 = scmp.ge.s32.totalorder %s14, 4
      %s24 = sphi 0, %s26
      %s27 = sphi 0, %s24
      %s28 = sphi 0, %s27
      %s44 = sphi 0, %s28
      %s48 = sphi 0, %s48
      %s50 = sphi 0, %s48
      %s51 = sphi 0, %s50
      %s65 = sphi 0, %s51
      %s69 = sphi 0, %s69
      %s71 = sphi 0, %s69
      %s72 = sphi 0, %s71
      %s86 = sphi 0, %s72
      %s90 = sphi 0, %s90
      %s92 = sphi 0, %s90
      %s93 = sphi 0, %s92
      %s107 = sphi 0, %s93
      %s111 = sphi 0, %s111
      %s113 = sphi 0, %s111
      %s114 = sphi 0, %s113
      %s128 = sphi 0, %s114
      %s134 = sphi 0, %s136
      %s137 = sphi 0, %s134
      %s138 = sphi 0, %s137
      %s154 = sphi 0, %s138
    $region4: #{mem_linear_forward.1} parent=1 // loop_header_branch
      %17 = sbr.rel (%p15) target = $region8
    $region5: #{mem_linear_forward.1} parent=1 // loop_body
      %s19 = ssub.s32 %s14, 1
      %s20 = ssub.s32 %s14, 2
      %s21 = sadd.s32 %s14, 1
      %s22 = ssub.s32 %s14, %s21
      %p23 = scmp.eq.s32.totalorder %s22, 0
      %s25 = sadd.s32 %s24, 1
      %s26 = scalar_select %p23, %s24, %s25
      %p29 = pneg %p23
      %p30 = scmp.eq.s32.totalorder %s14, 1
      %p31 = por %p29, %p30
      %p32 = scmp.ne.s32.totalorder %s24, %s27
      %p33 = scmp.eq.s32.totalorder %s14, 0
      %p34 = por %p32, %p33
      %p35 = scmp.ne.s32.totalorder %s24, %s27
      %p36 = scmp.eq.s32.totalorder %s19, 1
      %p37 = por %p35, %p36
      %p38 = scmp.ne.s32.totalorder %s27, %s28
      %p39 = scmp.eq.s32.totalorder %s19, 0
      %p40 = por %p38, %p39
      %p41 = scmp.ne.s32.totalorder %s27, %s28
      %p42 = scmp.eq.s32.totalorder %s20, 1
      %p43 = por %p41, %p42
      %p45 = scmp.ne.s32.totalorder %s28, %s44
      %p46 = scmp.eq.s32.totalorder %s20, 0
      %p47 = por %p45, %p46
      %s49 = sadd.s32 %s48, 1
      %p52 = scmp.eq.s32.totalorder %s14, 1
      %p53 = scmp.ne.s32.totalorder %s48, %s50
      %p54 = scmp.eq.s32.totalorder %s14, 0
      %p55 = por %p53, %p54
      %p56 = scmp.ne.s32.totalorder %s48, %s50
      %p57 = scmp.eq.s32.totalorder %s19, 1
      %p58 = por %p56, %p57
      %p59 = scmp.ne.s32.totalorder %s50, %s51
      %p60 = scmp.eq.s32.totalorder %s19, 0
      %p61 = por %p59, %p60
      %p62 = scmp.ne.s32.totalorder %s50, %s51
      %p63 = scmp.eq.s32.totalorder %s20, 1
      %p64 = por %p62, %p63
      %p66 = scmp.ne.s32.totalorder %s51, %s65
      %p67 = scmp.eq.s32.totalorder %s20, 0
      %p68 = por %p66, %p67
      %s70 = sadd.s32 %s69, 1
      %p73 = scmp.eq.s32.totalorder %s14, 1
      %p74 = scmp.ne.s32.totalorder %s69, %s71
      %p75 = scmp.eq.s32.totalorder %s14, 0
      %p76 = por %p74, %p75
      %p77 = scmp.ne.s32.totalorder %s69, %s71
      %p78 = scmp.eq.s32.totalorder %s19, 1
      %p79 = por %p77, %p78
      %p80 = scmp.ne.s32.totalorder %s71, %s72
      %p81 = scmp.eq.s32.totalorder %s19, 0
      %p82 = por %p80, %p81
      %p83 = scmp.ne.s32.totalorder %s71, %s72
      %p84 = scmp.eq.s32.totalorder %s20, 1
      %p85 = por %p83, %p84
      %p87 = scmp.ne.s32.totalorder %s72, %s86
      %p88 = scmp.eq.s32.totalorder %s20, 0
      %p89 = por %p87, %p88
      %s91 = sadd.s32 %s90, 1
      %p94 = scmp.eq.s32.totalorder %s14, 1
      %p95 = scmp.ne.s32.totalorder %s90, %s92
      %p96 = scmp.eq.s32.totalorder %s14, 0
      %p97 = por %p95, %p96
      %p98 = scmp.ne.s32.totalorder %s90, %s92
      %p99 = scmp.eq.s32.totalorder %s19, 1
      %p100 = por %p98, %p99
      %p101 = scmp.ne.s32.totalorder %s92, %s93
      %p102 = scmp.eq.s32.totalorder %s19, 0
      %p103 = por %p101, %p102
      %p104 = scmp.ne.s32.totalorder %s92, %s93
      %p105 = scmp.eq.s32.totalorder %s20, 1
      %p106 = por %p104, %p105
      %p108 = scmp.ne.s32.totalorder %s93, %s107
      %p109 = scmp.eq.s32.totalorder %s20, 0
      %p110 = por %p108, %p109
      %s112 = sadd.s32 %s111, 1
      %p115 = scmp.eq.s32.totalorder %s14, 1
      %p116 = scmp.ne.s32.totalorder %s111, %s113
      %p117 = scmp.eq.s32.totalorder %s14, 0
      %p118 = por %p116, %p117
      %p119 = scmp.ne.s32.totalorder %s111, %s113
      %p120 = scmp.eq.s32.totalorder %s19, 1
      %p121 = por %p119, %p120
      %p122 = scmp.ne.s32.totalorder %s113, %s114
      %p123 = scmp.eq.s32.totalorder %s19, 0
      %p124 = por %p122, %p123
      %p125 = scmp.ne.s32.totalorder %s113, %s114
      %p126 = scmp.eq.s32.totalorder %s20, 1
      %p127 = por %p125, %p126
      %p129 = scmp.ne.s32.totalorder %s114, %s128
      %p130 = scmp.eq.s32.totalorder %s20, 0
      %p131 = por %p129, %p130
      %s132 = ssub.s32 %s14, %s21
      %p133 = scmp.eq.s32.totalorder %s132, 0
      %s135 = sadd.s32 %s134, 1
      %s136 = scalar_select %p133, %s134, %s135
      %p139 = pneg %p133
      %p140 = scmp.eq.s32.totalorder %s14, 1
      %p141 = por %p139, %p140
      %p142 = scmp.ne.s32.totalorder %s134, %s137
      %p143 = scmp.eq.s32.totalorder %s14, 0
      %p144 = por %p142, %p143
      %p145 = scmp.ne.s32.totalorder %s134, %s137
      %p146 = scmp.eq.s32.totalorder %s19, 1
      %p147 = por %p145, %p146
      %p148 = scmp.ne.s32.totalorder %s137, %s138
      %p149 = scmp.eq.s32.totalorder %s19, 0
      %p150 = por %p148, %p149
      %p151 = scmp.ne.s32.totalorder %s137, %s138
      %p152 = scmp.eq.s32.totalorder %s20, 1
      %p153 = por %p151, %p152
      %p155 = scmp.ne.s32.totalorder %s138, %s154
      %p156 = scmp.eq.s32.totalorder %s20, 0
      %p157 = por %p155, %p156
      %p158 = scmp.le.s32.totalorder 1, %s14
      %p159 = scmp.lt.s32.totalorder %s14, 3
      %p160 = pnand %p158, %p159
      %p161 = pneg %p160
      // Predicated region
      $region9: #{mem_linear_forward.1} parent=5 // pred_check
        _
      $region10: #{mem_linear_forward.1} parent=5 // pred_check_branch
        %163 = sbr.rel (%p160) target = $region12
      $region11: #{mem_linear_forward.1} parent=5 // pred_region
        %s164 = ssub.s32 %s14, 1
        // Predicated region
        $region13: #{mem_linear_forward.1} parent=11 // pred_check
          %p165 = pneg %p61
        $region14: #{mem_linear_forward.1} parent=11 // pred_check_branch
          %167 = sbr.rel (%p165) target = $region16
        $region15: #{mem_linear_forward.1} parent=11 // pred_region
          _
        $region16: #{mem_linear_forward.1} parent=11 // pred_fallthru
          _
        // Predicated region
        $region17: #{mem_linear_forward.1} parent=11 // pred_check
          %p168 = pneg %p82
        $region18: #{mem_linear_forward.1} parent=11 // pred_check_branch
          %170 = sbr.rel (%p168) target = $region20
        $region19: #{mem_linear_forward.1} parent=11 // pred_region
          _
        $region20: #{mem_linear_forward.1} parent=11 // pred_fallthru
          _
        // Predicated region
        $region21: #{mem_linear_forward.1} parent=11 // pred_check
          %p171 = pneg %p103
        $region22: #{mem_linear_forward.1} parent=11 // pred_check_branch
          %173 = sbr.rel (%p171) target = $region24
        $region23: #{mem_linear_forward.1} parent=11 // pred_region
          _
        $region24: #{mem_linear_forward.1} parent=11 // pred_fallthru
          _
        // Predicated region
        $region25: #{mem_linear_forward.1} parent=11 // pred_check
          %p174 = pneg %p124
        $region26: #{mem_linear_forward.1} parent=11 // pred_check_branch
          %176 = sbr.rel (%p174) target = $region28
        $region27: #{mem_linear_forward.1} parent=11 // pred_region
          _
        $region28: #{mem_linear_forward.1} parent=11 // pred_fallthru
          _
      $region12: #{mem_linear_forward.1} parent=5 // pred_fallthru
        _
      %p177 = scmp.lt.s32.totalorder %s14, 2
      // Predicated region
      $region29: #{mem_linear_forward.1} parent=5 // pred_check
        %p178 = pneg %p177
      $region30: #{mem_linear_forward.1} parent=5 // pred_check_branch
        %180 = sbr.rel (%p178) target = $region32
      $region31: #{mem_linear_forward.1} parent=5 // pred_region
        // Predicated region
        $region33: #{mem_linear_forward.1} parent=31 // pred_check
          %p181 = pneg %p34
        $region34: #{mem_linear_forward.1} parent=31 // pred_check_branch
          %183 = sbr.rel (%p181) target = $region36
        $region35: #{mem_linear_forward.1} parent=31 // pred_region
          %s184 = smul.u32 3, %s14
          %p185 = scmp.lt.s32.totalorder %s184, 5
          %s186 = scalar_select %p185, %s184, 5
          %s187 = smul.addr %s186, 2
          %s188 = smul.addr %s187, 8
          %s189 = scalar_lea.vmem %s0, %s188
          %s190 = smul.u32 3, %s14
        $region36: #{mem_linear_forward.1} parent=31 // pred_fallthru
          _
      $region32: #{mem_linear_forward.1} parent=5 // pred_fallthru
        _
      %p191 = scmp.le.s32.totalorder 1, %s14
      %p192 = scmp.lt.s32.totalorder %s14, 3
      %p193 = pnand %p191, %p192
      %p194 = pneg %p193
      // Predicated region
      $region37: #{mem_linear_forward.1} parent=5 // pred_check
        _
      $region38: #{mem_linear_forward.1} parent=5 // pred_check_branch
        %196 = sbr.rel (%p193) target = $region40
      $region39: #{mem_linear_forward.1} parent=5 // pred_region
        %s197 = ssub.s32 %s14, 1
        %s198 = smul.u32 3, %s19
        %p199 = scmp.lt.s32.totalorder %s198, 5
        %s200 = scalar_select %p199, %s198, 5
        %s201 = smul.addr %s200, 2
        %s202 = smul.addr %s201, 8
        %s203 = scalar_lea.vmem %s0, %s202
        %p204 = pneg %p40
        %p205 = pneg %p37
        %p206 = pneg %p61
        %p207 = pneg %p58
        %p208 = pneg %p82
        %p209 = pneg %p79
        %p210 = pneg %p103
        %p211 = pneg %p100
        %p212 = pneg %p124
        %p213 = pneg %p121
        %p214 = pneg %p150
        %p215 = pneg %p147
        %s216 = sand.u32 %s137, 1
        %s217 = scalar_lea.sflag [#allocation3], %s216
        %s218 = sand.u32 %s137, 1
        %s219 = smul.addr %s218, 48
        %s220 = scalar_lea.vmem [#allocation2], %s219
        %s221 = smul.u32 3, %s19
        %p222 = scmp.lt.s32.totalorder %s221, 5
        %s223 = scalar_select %p222, %s221, 5
        %s224 = smul.addr %s223, 2
        %s225 = smul.addr %s224, 8
        %s226 = scalar_lea.vmem %s0, %s225
        %s227 = smul.u32 3, %s19
        %s228 = smul.u32 3, %s19
        %v229 = vld [vmem:[%s226] sm:$0xff]
        %v230 = vld [vmem:[%s226 + $0x10] sm:$0xff]
        %v231 = vld [vmem:[%s226 + $0x20] sm:$0xff]
        %v232 = vld [vmem:[%s226 + $0x8] sm:$0xff]
        %v233 = vld [vmem:[%s226 + $0x18] sm:$0xff]
        %v234 = vld [vmem:[%s226 + $0x28] sm:$0xff]
        %v235 = vld [vmem:[%s1] sm:$0xff]
        %v236 = vld [vmem:[%s1 + $0x8] sm:$0xff]
        %v237 = vld [vmem:[%s1 + $0x10] sm:$0xff]
        %v238 = vld [vmem:[%s1 + $0x18] sm:$0xff]
        %v239 = vld [vmem:[%s1 + $0x20] sm:$0xff]
        %v240 = vld [vmem:[%s1 + $0x28] sm:$0xff]
        %v241 = vld [vmem:[%s1 + $0x30] sm:$0xff]
        %v242 = vld [vmem:[%s1 + $0x38] sm:$0xff]
        %v243 = vld [vmem:[%s1 + $0x40] sm:$0xff]
        %v244 = vld [vmem:[%s1 + $0x48] sm:$0xff]
        %v245 = vld [vmem:[%s1 + $0x50] sm:$0xff]
        %v246 = vld [vmem:[%s1 + $0x58] sm:$0xff]
        %v247 = vld [vmem:[%s1 + $0x60] sm:$0xff]
        %v248 = vld [vmem:[%s1 + $0x68] sm:$0xff]
        %v249 = vld [vmem:[%s1 + $0x70] sm:$0xff]
        %v250 = vld [vmem:[%s1 + $0x78] sm:$0xff]
        %v251 = vld [vmem:[%s2] sm:$0x1]
        %v253 = vperm.slane %v251, 0
        %255 = vmatpush.msra.mxu0 %v250
        %256 = vmatpush.msra.mxu0 %v249
        %257 = vmatpush.msra.mxu0 %v248
        %258 = vmatpush.msra.mxu0 %v247
        %259 = vmatpush.msra.mxu0 %v246
        %260 = vmatpush.msra.mxu0 %v245
        %261 = vmatpush.msra.mxu0 %v244
        %262 = vmatpush.msra.mxu0 %v243
        %263 = vmatpush.msra.mxu0 %v242
        %264 = vmatpush.msra.mxu0 %v241
        %265 = vmatpush.msra.mxu0 %v240
        %266 = vmatpush.msra.mxu0 %v239
        %267 = vmatpush.msra.mxu0 %v238
        %268 = vmatpush.msra.mxu0 %v237
        %269 = vmatpush.msra.mxu0 %v236
        %270 = vmatpush.msra.mxu0 %v235
        %271 = vmatmul.f32.gmra.mxu0 %v232
        %v272 = vpop.f32.mrf.mxu0
        %v273 = vadd.f32 %v253, %v272
        %274 = vmatmul.f32.gmra.mxu0 %v233
        %v275 = vpop.f32.mrf.mxu0
        %v276 = vadd.f32 %v253, %v275
        %277 = vmatmul.f32.gmra.mxu0 %v234
        %v278 = vpop.f32.mrf.mxu0
        %v279 = vadd.f32 %v253, %v278
        %280 = vdwg.mxu0
        %vm281 = vcmp.ge.f32.partialorder %v273, 0.0
        %vm282 = vcmp.ge.f32.partialorder %v276, 0.0
        %vm283 = vcmp.ge.f32.partialorder %v279, 0.0
        %v284 = vmul.f32 %v273, 0.01
        %v285 = vmul.f32 %v276, 0.01
        %v286 = vmul.f32 %v279, 0.01
        %v287 = vsel %vm281, %v273, %v284
        %v288 = vsel %vm282, %v276, %v285
        %v289 = vsel %vm283, %v279, %v286
        %v290 = vadd.f32 %v229, %v287
        %v291 = vadd.f32 %v230, %v288
        %v292 = vadd.f32 %v231, %v289
        %v293 = vld [vmem:[%s3] sm:$0xff]
        %v294 = vld [vmem:[%s3 + $0x8] sm:$0xff]
        %v295 = vld [vmem:[%s3 + $0x10] sm:$0xff]
        %v296 = vld [vmem:[%s3 + $0x18] sm:$0xff]
        %v297 = vld [vmem:[%s3 + $0x20] sm:$0xff]
        %v298 = vld [vmem:[%s3 + $0x28] sm:$0xff]
        %v299 = vld [vmem:[%s3 + $0x30] sm:$0xff]
        %v300 = vld [vmem:[%s3 + $0x38] sm:$0xff]
        %v301 = vld [vmem:[%s3 + $0x40] sm:$0xff]
        %v302 = vld [vmem:[%s3 + $0x48] sm:$0xff]
        %v303 = vld [vmem:[%s3 + $0x50] sm:$0xff]
        %v304 = vld [vmem:[%s3 + $0x58] sm:$0xff]
        %v305 = vld [vmem:[%s3 + $0x60] sm:$0xff]
        %v306 = vld [vmem:[%s3 + $0x68] sm:$0xff]
        %v307 = vld [vmem:[%s3 + $0x70] sm:$0xff]
        %v308 = vld [vmem:[%s3 + $0x78] sm:$0xff]
        %v309 = vld [vmem:[%s4] sm:$0x1]
        %v311 = vperm.slane %v309, 0
        %313 = vmatpush.msra.mxu0 %v308
        %314 = vmatpush.msra.mxu0 %v307
        %315 = vmatpush.msra.mxu0 %v306
        %316 = vmatpush.msra.mxu0 %v305
        %317 = vmatpush.msra.mxu0 %v304
        %318 = vmatpush.msra.mxu0 %v303
        %319 = vmatpush.msra.mxu0 %v302
        %320 = vmatpush.msra.mxu0 %v301
        %321 = vmatpush.msra.mxu0 %v300
        %322 = vmatpush.msra.mxu0 %v299
        %323 = vmatpush.msra.mxu0 %v298
        %324 = vmatpush.msra.mxu0 %v297
        %325 = vmatpush.msra.mxu0 %v296
        %326 = vmatpush.msra.mxu0 %v295
        %327 = vmatpush.msra.mxu0 %v294
        %328 = vmatpush.msra.mxu0 %v293
        %329 = vmatmul.f32.gmra.mxu0 %v290
        %v330 = vpop.f32.mrf.mxu0
        %v331 = vadd.f32 %v311, %v330
        %332 = vmatmul.f32.gmra.mxu0 %v291
        %v333 = vpop.f32.mrf.mxu0
        %v334 = vadd.f32 %v311, %v333
        %335 = vmatmul.f32.gmra.mxu0 %v292
        %v336 = vpop.f32.mrf.mxu0
        %v337 = vadd.f32 %v311, %v336
        %338 = vdwg.mxu0
        %vm339 = vcmp.ge.f32.partialorder %v331, 0.0
        %vm340 = vcmp.ge.f32.partialorder %v334, 0.0
        %vm341 = vcmp.ge.f32.partialorder %v337, 0.0
        %v342 = vmul.f32 %v331, 0.01
        %v343 = vmul.f32 %v334, 0.01
        %v344 = vmul.f32 %v337, 0.01
        %v345 = vsel %vm339, %v331, %v342
        %v346 = vsel %vm340, %v334, %v343
        %v347 = vsel %vm341, %v337, %v344
        %v348 = vadd.f32 %v232, %v345
        %v349 = vadd.f32 %v233, %v346
        %v350 = vadd.f32 %v234, %v347
        %351 = vst [vmem:[%s220] sm:$0xff] %v290
        %352 = vst [vmem:[%s220 + $0x10] sm:$0xff] %v291
        %353 = vst [vmem:[%s220 + $0x20] sm:$0xff] %v292
        %354 = vst [vmem:[%s220 + $0x8] sm:$0xff] %v348
        %355 = vst [vmem:[%s220 + $0x18] sm:$0xff] %v349
        %356 = vst [vmem:[%s220 + $0x28] sm:$0xff] %v350
        %s357 = sand.u32 %s137, 1
        %s358 = scalar_lea.sflag [#allocation3], %s357
        %s359 = sand.u32 %s137, 1
        %s360 = smul.addr %s359, 48
        %s361 = scalar_lea.vmem [#allocation2], %s360
        // Predicated region
        $region41: #{mem_linear_forward.1} parent=39 // pred_check
          %p362 = pneg %p147
        $region42: #{mem_linear_forward.1} parent=39 // pred_check_branch
          %364 = sbr.rel (%p362) target = $region44
        $region43: #{mem_linear_forward.1} parent=39 // pred_region
          %s365 = smul.u32 3, %s19
          %367 = vsyncadd %s358, 0
          %s368 = smul.addr %s365, 2
          %s369 = smul.addr %s368, 8
          %s370 = scalar_lea.hbm %s5, %s369
          %s371 = sshll.u32 %s361, 4
          %s372 = int_to_ptr.vmem [resolvable:$true] %s371
          %s373 = sshll.u32 %s370, 4
          %s374 = int_to_ptr.hbm [resolvable:$true] %s373
          %379 = dma.vmem_to_hbm [thread:$0]  %s372, 768, %s374, %s358, 256, 256, 16
        $region44: #{mem_linear_forward.1} parent=39 // pred_fallthru
          _
      $region40: #{mem_linear_forward.1} parent=5 // pred_fallthru
        _
      %p380 = scmp.le.s32.totalorder 2, %s14
      // Predicated region
      $region45: #{mem_linear_forward.1} parent=5 // pred_check
        %p381 = pneg %p380
      $region46: #{mem_linear_forward.1} parent=5 // pred_check_branch
        %383 = sbr.rel (%p381) target = $region48
      $region47: #{mem_linear_forward.1} parent=5 // pred_region
        %s384 = ssub.s32 %s14, 2
        // Predicated region
        $region49: #{mem_linear_forward.1} parent=47 // pred_check
          %p385 = pneg %p153
        $region50: #{mem_linear_forward.1} parent=47 // pred_check_branch
          %387 = sbr.rel (%p385) target = $region52
        $region51: #{mem_linear_forward.1} parent=47 // pred_region
          %s388 = sand.u32 %s138, 1
          %s389 = scalar_lea.sflag [#allocation3], %s388
          %s390 = sand.u32 %s138, 1
          %s391 = smul.addr %s390, 48
          %s392 = scalar_lea.vmem [#allocation2], %s391
          %394 = dma.done %s389, 768
        $region52: #{mem_linear_forward.1} parent=47 // pred_fallthru
          _
      $region48: #{mem_linear_forward.1} parent=5 // pred_fallthru
        _
    $region6: #{mem_linear_forward.1} parent=1 // loop_footer
      %s18 = sadd.s32 1, %s14
    $region7: #{mem_linear_forward.1} parent=1 // loop_footer_branch
      %13 = sbr.rel target = $region3
    $region8: #{mem_linear_forward.1} parent=1 // loop_exit
      _
    %395 = vsyncpa [#allocation3], 1
    %s396 = scalar_lea.sflag [#allocation3], 1
    %397 = vsyncpa %s396, 1

</llo_original>
